<compile_context>
chip_gen: v5e
topology: v5e:2x2
jax: 0.10.0
libtpu: 0.0.40
codegen_flags: <defaults>
</compile_context>

<pallas_src>
import math

import jax
import jax.numpy as jnp
from jax.experimental import pallas as pl
from jax.experimental.pallas import tpu as pltpu


_LANE = 128              # multi-tile out blocks must be lane-multiples
_MIN_TILE = 256          # rows/step floor (512-row tiles already ~85% of HBM roofline)
_TARGET_STEPS = 4        # aim for 2-4 pipelined grid steps
_BLOCK_BYTES_CAP = 1 << 20   # ~1 MiB per input block keeps VMEM safe on v7x (32 MiB scoped)


def _pick_tile(rows: int, d: int, itemsize: int) -> int:
    """Rows per grid step for one descriptor tensor."""
    if rows <= _MIN_TILE:
        return rows                                    # single full-array block
    max_tile = max(_LANE, (_BLOCK_BYTES_CAP // (d * itemsize)) // _LANE * _LANE)
    tile = -(-rows // _TARGET_STEPS)                   # cdiv
    tile = min(max(tile, _MIN_TILE), max_tile)
    return -(-tile // _LANE) * _LANE                   # lane multiple -> legal (1, tile) out block


def _token_confidence_kernel(x0_ref, x1_ref, w_ref, b_ref, o0_ref, o1_ref):
    """Fused Linear(D->1) + Sigmoid over one row-tile of each descriptor set."""
    w = w_ref[...].astype(jnp.float32)                 # (1, D)  resident across all steps
    b = b_ref[...].astype(jnp.float32)                 # (1, 1)

    def one(x_ref, o_ref):
        # In-kernel ".detach().float()" cast: HBM traffic stays at native width.
        x = x_ref[...].astype(jnp.float32)             # (tile, D)
        # K=D, N=1 contraction as VPU broadcast-mul + cross-lane reduce, then
        # relayout the per-row result to a lane-dense (1, tile) row.
        logits = jnp.sum(x * w, axis=-1)[None, :] + b  # (1, tile)
        # sigmoid(x) = 0.5 * tanh(x/2) + 0.5  (stable, EUP, no divide)
        o_ref[...] = (0.5 * jnp.tanh(0.5 * logits) + 0.5).astype(o_ref.dtype)

    one(x0_ref, o0_ref)
    one(x1_ref, o1_ref)


def token_confidence(desc0: jax.Array, desc1: jax.Array,
                     weight: jax.Array, bias: jax.Array):
    """Pallas equivalent of TokenConfidence.forward(desc0, desc1) -> (conf0, conf1)."""
    *lead0, D = desc0.shape
    *lead1, D1 = desc1.shape
    assert D == D1, "descriptor dims must match"

    rows0 = math.prod(lead0)
    rows1 = math.prod(lead1)

    x0 = desc0.reshape(rows0, D)                       # native dtype; f32 cast in-kernel
    x1 = desc1.reshape(rows1, D)
    w = weight.reshape(1, D)
    b = bias.reshape(1, 1)

    tile0 = _pick_tile(rows0, D, x0.dtype.itemsize)
    tile1 = _pick_tile(rows1, D, x1.dtype.itemsize)
    nt0 = pl.cdiv(rows0, tile0)
    nt1 = pl.cdiv(rows1, tile1)
    n_steps = max(nt0, nt1)

    # The shorter descriptor re-processes its last tile on the extra steps
    # (clamped index map, idempotent rewrite) -> one pallas_call, no concat.
    def in_map(nt):
        if nt == n_steps:
            return lambda i: (i, 0)
        last = nt - 1
        return lambda i: (jnp.minimum(i, last), 0)

    def out_map(nt):
        if nt == n_steps:
            return lambda i: (0, i)
        last = nt - 1
        return lambda i: (0, jnp.minimum(i, last))

    out0, out1 = pl.pallas_call(
        _token_confidence_kernel,
        out_shape=(
            jax.ShapeDtypeStruct((1, rows0), jnp.float32),
            jax.ShapeDtypeStruct((1, rows1), jnp.float32),
        ),
        grid_spec=pl.GridSpec(
            grid=(n_steps,),
            in_specs=[
                pl.BlockSpec((tile0, D), in_map(nt0)),
                pl.BlockSpec((tile1, D), in_map(nt1)),
                pl.BlockSpec((1, D), lambda i: (0, 0)),     # weight: same block every step
                pl.BlockSpec((1, 1), lambda i: (0, 0)),     # bias
            ],
            out_specs=(
                pl.BlockSpec((1, tile0), out_map(nt0)),     # lane-dense confidence rows
                pl.BlockSpec((1, tile1), out_map(nt1)),
            ),
        ),
        compiler_params=pltpu.CompilerParams(
            # Distinct output block per step only when both tilings line up;
            # clamped revisits otherwise force sequential ("arbitrary") order.
            dimension_semantics=("parallel",) if nt0 == nt1 else ("arbitrary",),
        ),
    )(x0, x1, w, b)

    return out0.reshape(tuple(lead0)), out1.reshape(tuple(lead1))


def _reference(desc, weight, bias):
    x = desc.astype(jnp.float32)
    w = weight.astype(jnp.float32).reshape(-1)
    b = bias.astype(jnp.float32).reshape(())
    return jax.nn.sigmoid(jnp.einsum("bnd,d->bn", x, w) + b)


if __name__ == "__main__":
    dim = 32
    key = jax.random.PRNGKey(0)
    k0, k1, k2, k3, kw, kb = jax.random.split(key, 6)

    weight = 0.1 * jax.random.normal(kw, (1, dim), dtype=jnp.float32)   # nn.Linear(dim, 1).weight
    bias = 0.1 * jax.random.normal(kb, (1,), dtype=jnp.float32)         # nn.Linear(dim, 1).bias

    # Case 1: tiny LightGlue-like shapes (single grid step, full-array blocks).
    B, N0, N1 = 2, 8, 13
    desc0 = jax.random.normal(k0, (B, N0, dim), dtype=jnp.float32)
    desc1 = jax.random.normal(k1, (B, N1, dim), dtype=jnp.float32)
    conf0, conf1 = jax.block_until_ready(token_confidence(desc0, desc1, weight, bias))
    assert conf0.shape == (B, N0), conf0.shape
    assert conf1.shape == (B, N1), conf1.shape
    assert jnp.allclose(conf0, _reference(desc0, weight, bias), atol=1e-5, rtol=1e-5), "conf0 mismatch"
    assert jnp.allclose(conf1, _reference(desc1, weight, bias), atol=1e-5, rtol=1e-5), "conf1 mismatch"

    # Case 2: multi-tile grid, unequal step counts, partial last block
    # (exercises lane-dense tiled outputs, clamped index maps, masked edge writes).
    descA = jax.random.normal(k2, (1, 600, dim), dtype=jnp.float32)
    descB = jax.random.normal(k3, (1, 384, dim), dtype=jnp.float32)
    confA, confB = jax.block_until_ready(token_confidence(descA, descB, weight, bias))
    assert confA.shape == (1, 600) and confB.shape == (1, 384)
    assert jnp.allclose(confA, _reference(descA, weight, bias), atol=1e-5, rtol=1e-5), "confA mismatch"
    assert jnp.allclose(confB, _reference(descB, weight, bias), atol=1e-5, rtol=1e-5), "confB mismatch"

    print("KERNEL_OK")
</pallas_src>

<mosaic_0001>
module attributes {stable_mosaic.version = 11 : i64} {
  func.func @_token_confidence_kernel(%arg0: i32, %arg1: memref<16x32xf32, #tpu.memory_space<vmem>>, %arg2: memref<26x32xf32, #tpu.memory_space<vmem>>, %arg3: memref<1x32xf32, #tpu.memory_space<vmem>>, %arg4: memref<1x1xf32, #tpu.memory_space<vmem>>, %arg5: memref<1x16xf32, #tpu.memory_space<vmem>>, %arg6: memref<1x26xf32, #tpu.memory_space<vmem>>) attributes {dimension_semantics = [#tpu.dimension_semantics<parallel>], iteration_bounds = array<i64: 1>, scalar_prefetch = 0 : i64, scratch_operands = 0 : i64, tpu.core_type = #tpu.core_type<tc>, window_params = [{transform_indices = @transform_0, window_bounds = array<i64: 16, 32>}, {transform_indices = @transform_1, window_bounds = array<i64: 26, 32>}, {pipeline_mode = #tpu.pipeline_mode<synchronous>, transform_indices = @transform_2, window_bounds = array<i64: 1, 32>}, {pipeline_mode = #tpu.pipeline_mode<synchronous>, transform_indices = @transform_3, window_bounds = array<i64: 1, 1>}, {transform_indices = @transform_4, window_bounds = array<i64: 1, 16>}, {transform_indices = @transform_5, window_bounds = array<i64: 1, 26>}]} {
    %c0 = arith.constant 0 : index
    %c0_0 = arith.constant 0 : index
    %0 = vector.load %arg3[%c0, %c0_0] : memref<1x32xf32, #tpu.memory_space<vmem>>, vector<1x32xf32>
    %c0_1 = arith.constant 0 : index
    %c0_2 = arith.constant 0 : index
    %1 = vector.load %arg4[%c0_1, %c0_2] : memref<1x1xf32, #tpu.memory_space<vmem>>, vector<1x1xf32>
    %c0_3 = arith.constant 0 : index
    %c0_4 = arith.constant 0 : index
    %2 = vector.load %arg1[%c0_3, %c0_4] : memref<16x32xf32, #tpu.memory_space<vmem>>, vector<16x32xf32>
    %3 = vector.broadcast %0 : vector<1x32xf32> to vector<16x32xf32>
    %4 = arith.mulf %2, %3 : vector<16x32xf32>
    %cst = arith.constant dense<0.000000e+00> : vector<16xf32>
    %5 = vector.multi_reduction <add>, %4, %cst [1] : vector<16x32xf32> to vector<16xf32>
    %6 = vector.shape_cast %5 : vector<16xf32> to vector<1x16xf32>
    %7 = vector.broadcast %1 : vector<1x1xf32> to vector<1x16xf32>
    %8 = arith.addf %6, %7 : vector<1x16xf32>
    %cst_5 = arith.constant 5.000000e-01 : f32
    %9 = vector.broadcast %cst_5 : f32 to vector<1x16xf32>
    %10 = arith.mulf %9, %8 : vector<1x16xf32>
    %11 = math.tanh %10 : vector<1x16xf32>
    %cst_6 = arith.constant 5.000000e-01 : f32
    %12 = vector.broadcast %cst_6 : f32 to vector<1x16xf32>
    %13 = arith.mulf %12, %11 : vector<1x16xf32>
    %cst_7 = arith.constant 5.000000e-01 : f32
    %14 = vector.broadcast %cst_7 : f32 to vector<1x16xf32>
    %15 = arith.addf %13, %14 : vector<1x16xf32>
    %c0_8 = arith.constant 0 : index
    %c0_9 = arith.constant 0 : index
    %16 = vector.load %arg5[%c0_8, %c0_9] : memref<1x16xf32, #tpu.memory_space<vmem>>, vector<1x16xf32>
    tpu.vector_store %arg5[%c0_8, %c0_9], %15 {strides = array<i32>} : memref<1x16xf32, #tpu.memory_space<vmem>>, vector<1x16xf32>,
    %c0_10 = arith.constant 0 : index
    %c0_11 = arith.constant 0 : index
    %17 = vector.load %arg2[%c0_10, %c0_11] : memref<26x32xf32, #tpu.memory_space<vmem>>, vector<26x32xf32>
    %18 = vector.broadcast %0 : vector<1x32xf32> to vector<26x32xf32>
    %19 = arith.mulf %17, %18 : vector<26x32xf32>
    %cst_12 = arith.constant dense<0.000000e+00> : vector<26xf32>
    %20 = vector.multi_reduction <add>, %19, %cst_12 [1] : vector<26x32xf32> to vector<26xf32>
    %21 = vector.shape_cast %20 : vector<26xf32> to vector<1x26xf32>
    %22 = vector.broadcast %1 : vector<1x1xf32> to vector<1x26xf32>
    %23 = arith.addf %21, %22 : vector<1x26xf32>
    %cst_13 = arith.constant 5.000000e-01 : f32
    %24 = vector.broadcast %cst_13 : f32 to vector<1x26xf32>
    %25 = arith.mulf %24, %23 : vector<1x26xf32>
    %26 = math.tanh %25 : vector<1x26xf32>
    %cst_14 = arith.constant 5.000000e-01 : f32
    %27 = vector.broadcast %cst_14 : f32 to vector<1x26xf32>
    %28 = arith.mulf %27, %26 : vector<1x26xf32>
    %cst_15 = arith.constant 5.000000e-01 : f32
    %29 = vector.broadcast %cst_15 : f32 to vector<1x26xf32>
    %30 = arith.addf %28, %29 : vector<1x26xf32>
    %c0_16 = arith.constant 0 : index
    %c0_17 = arith.constant 0 : index
    %31 = vector.load %arg6[%c0_16, %c0_17] : memref<1x26xf32, #tpu.memory_space<vmem>>, vector<1x26xf32>
    tpu.vector_store %arg6[%c0_16, %c0_17], %30 {strides = array<i32>} : memref<1x26xf32, #tpu.memory_space<vmem>>, vector<1x26xf32>,
    return
  }
  func.func @transform_0(%arg0: i32) -> (i32, i32) {
    %c0_i32 = arith.constant 0 : i32
    %c0_i32_0 = arith.constant 0 : i32
    return %arg0, %c0_i32 : i32, i32
  }
  func.func @transform_1(%arg0: i32) -> (i32, i32) {
    %c0_i32 = arith.constant 0 : i32
    %c0_i32_0 = arith.constant 0 : i32
    return %arg0, %c0_i32 : i32, i32
  }
  func.func @transform_2(%arg0: i32) -> (i32, i32) {
    %c0_i32 = arith.constant 0 : i32
    %c0_i32_0 = arith.constant 0 : i32
    %c0_i32_1 = arith.constant 0 : i32
    return %c0_i32, %c0_i32_0 : i32, i32
  }
  func.func @transform_3(%arg0: i32) -> (i32, i32) {
    %c0_i32 = arith.constant 0 : i32
    %c0_i32_0 = arith.constant 0 : i32
    %c0_i32_1 = arith.constant 0 : i32
    return %c0_i32, %c0_i32_0 : i32, i32
  }
  func.func @transform_4(%arg0: i32) -> (i32, i32) {
    %c0_i32 = arith.constant 0 : i32
    %c0_i32_0 = arith.constant 0 : i32
    return %c0_i32, %arg0 : i32, i32
  }
  func.func @transform_5(%arg0: i32) -> (i32, i32) {
    %c0_i32 = arith.constant 0 : i32
    %c0_i32_0 = arith.constant 0 : i32
    return %c0_i32, %arg0 : i32, i32
  }
}

</mosaic_0001>

<llo_original>
// kernel: tpu_custom_call.1
$region0: #{tpu_custom_call.1}
  #allocation0 [shape = 'u32[]', space=smem, size = 0x4, offset = 0x4, fixed_abs, tag = 'smem constant byte address 0x4 - core index']
  #allocation1 [shape = 'u32[72,128]{1,0:T(1,128)}', space=vmem, size = 0x9000, scoped, tag = 'internal scratch']
  #allocation2 [shape = 'f32[1,1]{1,0:T(1,128)S(1)}', space=vmem, size = 0x200, scoped, tag = 'scoped memory for tpu_custom_call.1']
  %s0 = inlined_call_operand.hbm [shape: f32[16,32], index: 0, kind: input, shape index: {}]
  %s1 = inlined_call_operand.hbm [shape: f32[26,32], index: 1, kind: input, shape index: {}]
  %s2 = inlined_call_operand.vmem [shape: f32[1,32], index: 2, kind: input, shape index: {}]
  %s3 = inlined_call_operand.<no memory space> [shape: f32[1,1], index: 3, kind: input, shape index: {}]
  %s4 = inlined_call_operand.hbm [shape: f32[1,16], index: 4, kind: output, shape index: {0}]
  %s5 = inlined_call_operand.hbm [shape: f32[1,26], index: 5, kind: output, shape index: {1}]
  %6 = xla_tuple %s4, %s5
  %s7 = sld [smem:[#allocation0]]
  $region42: #{tpu_custom_call.1} parent=0
    _
  %s9 = ssub.s32 1, %s7
  %s10 = scalar_select 0, %s9, %s7
  %v11 = vstv %s3
  %12 = vst [vmem:[#allocation2] sm:$0x1] %v11
  $region1: #{tpu_custom_call.1} parent=0
    #allocation3 [shape = 'u8[8192]{0}', space=vmem, size = 0x2000, scoped, tag = 'input window, operand 0, single buffered']
    #allocation4 [shape = 's32[1]{0}', space=sflag, size = 0x4, scoped, tag = 'scoped memory for tpu_custom_call.1']
    #allocation5 [shape = 's32[1]{0}', space=sflag, size = 0x4, scoped, tag = 'scoped memory for tpu_custom_call.1']
    #allocation6 [shape = 'u8[16384]{0}', space=vmem, size = 0x4000, scoped, tag = 'input window, operand 1, single buffered']
    #allocation7 [shape = 's32[1]{0}', space=sflag, size = 0x4, scoped, tag = 'scoped memory for tpu_custom_call.1']
    #allocation8 [shape = 'u8[512]{0}', space=vmem, size = 0x400, scoped, tag = 'output window, operand 0, single buffered']
    #allocation9 [shape = 'u8[512]{0}', space=vmem, size = 0x400, scoped, tag = 'output window, operand 1, single buffered']
    #allocation10 [shape = 's32[1]{0}', space=sflag, size = 0x4, scoped, tag = 'scoped memory for tpu_custom_call.1']
    %13 = vsyncpa [#allocation4], 0
    %14 = vsyncpa [#allocation7], 0
    %15 = vsyncpa [#allocation5], 0
    %16 = vsyncpa [#allocation10], 0
    // Predicated region
    $region2: #{tpu_custom_call.1} parent=1 // pred_check
      _
    $region3: #{tpu_custom_call.1} parent=1 // pred_check_branch
      %18 = sbr.rel (0) target = $region5
    $region4: #{tpu_custom_call.1} parent=1 // pred_region
      %20 = vsyncadd [#allocation4], 0
      %s21 = sshll.u32 %s0, 4
      %s22 = int_to_ptr.hbm [resolvable:$true] %s21
      %s23 = sshll.u32 [#allocation3], 4
      %s24 = int_to_ptr.vmem [resolvable:$true] %s23
      %29 = dma.hbm_to_vmem [thread:$0]  %s22, 256, %s24, [#allocation4], 128, 128, 8
    $region5: #{tpu_custom_call.1} parent=1 // pred_fallthru
      _
    // Predicated region
    $region6: #{tpu_custom_call.1} parent=1 // pred_check
      _
    $region7: #{tpu_custom_call.1} parent=1 // pred_check_branch
      %31 = sbr.rel (0) target = $region9
    $region8: #{tpu_custom_call.1} parent=1 // pred_region
      %33 = vsyncadd [#allocation7], 0
      %s34 = sshll.u32 %s1, 4
      %s35 = int_to_ptr.hbm [resolvable:$true] %s34
      %s36 = sshll.u32 [#allocation6], 4
      %s37 = int_to_ptr.vmem [resolvable:$true] %s36
      %42 = dma.hbm_to_vmem [thread:$0]  %s35, 512, %s37, [#allocation7], 128, 128, 8
    $region9: #{tpu_custom_call.1} parent=1 // pred_fallthru
      _
    // Predicated region
    $region10: #{tpu_custom_call.1} parent=1 // pred_check
      _
    $region11: #{tpu_custom_call.1} parent=1 // pred_check_branch
      %44 = sbr.rel (0) target = $region13
    $region12: #{tpu_custom_call.1} parent=1 // pred_region
      _
    $region13: #{tpu_custom_call.1} parent=1 // pred_fallthru
      _
    // Predicated region
    $region14: #{tpu_custom_call.1} parent=1 // pred_check
      _
    $region15: #{tpu_custom_call.1} parent=1 // pred_check_branch
      %46 = sbr.rel (0) target = $region17
    $region16: #{tpu_custom_call.1} parent=1 // pred_region
      _
    $region17: #{tpu_custom_call.1} parent=1 // pred_fallthru
      _
    // Predicated region
    $region18: #{tpu_custom_call.1} parent=1 // pred_check
      _
    $region19: #{tpu_custom_call.1} parent=1 // pred_check_branch
      %48 = sbr.rel (0) target = $region21
    $region20: #{tpu_custom_call.1} parent=1 // pred_region
      %50 = dma.done [#allocation4], 256
    $region21: #{tpu_custom_call.1} parent=1 // pred_fallthru
      _
    // Predicated region
    $region22: #{tpu_custom_call.1} parent=1 // pred_check
      _
    $region23: #{tpu_custom_call.1} parent=1 // pred_check_branch
      %52 = sbr.rel (0) target = $region25
    $region24: #{tpu_custom_call.1} parent=1 // pred_region
      %54 = dma.done [#allocation7], 512
    $region25: #{tpu_custom_call.1} parent=1 // pred_fallthru
      _
    %v55 = vld [vmem:[%s2] sm:$0x1]
    %v56 = vld [vmem:[#allocation2] sm:$0x1]
    %v57 = vld [vmem:[#allocation3] sm:$0xff]
    %v58 = vld [vmem:[#allocation3 + $0x8] sm:$0xff]
    %v60 = vperm.slane %v55, 0
    %v62 = vmul.f32 %v57, %v60
    %v63 = vmul.f32 %v58, %v60
    %vm64 = vcmask 261120
    %v65 = vsel %vm64, %v62, 0.0
    %66 = vadd.xlane.f32.xlu0 %v65
    %v67 = vpop.xlane.xlu0 %66
    %v68 = vsel %vm64, %v63, 0.0
    %69 = vadd.xlane.f32.xlu0 %v68
    %v70 = vpop.xlane.xlu0 %69
    %72 = vset.pattern.permute.xlu0 0
    %73 = vperm.xlu0 %72, %v56
    %v74 = vpop.permute.xlu0 %73
    %v76 = vperm.slane %v74, 0
    %v77 = vadd.f32 %v67, %v76
    %v78 = vadd.f32 %v70, %v76
    %v79 = vmul.f32 %v77, 0.5
    %v80 = vmul.f32 %v78, 0.5
    %v81 = vtanh.pop %v79
    %v82 = vtanh.pop %v80
    %v83 = vmul.f32 %v81, 0.5
    %v84 = vmul.f32 %v82, 0.5
    %v85 = vadd.f32 %v83, 0.5
    %v86 = vadd.f32 %v84, 0.5
    %v89 = vlaneseq
    %v90 = vand.u32 %v89, 127
    %v91 = vperm.slane %v85, %v90
    %v92 = vadd.s32 %v90, 4294967288
    %v93 = vperm.slane %v86, %v92
    %vm94 = vcmask 130112
    %v95 = vsel %vm94, %v93, %v91
    %vm97 = vcmask 122880
    %98 = vst.msk [vmem:[#allocation8] sm:$0x1] %vm97, %v95
    %v99 = vld [vmem:[#allocation6] sm:$0xff]
    %v100 = vld [vmem:[#allocation6 + $0x8] sm:$0xff]
    %v101 = vld [vmem:[#allocation6 + $0x10] sm:$0xff]
    %v102 = vld [vmem:[#allocation6 + $0x18] sm:$0x3]
    %v103 = vmul.f32 %v99, %v60
    %v104 = vmul.f32 %v100, %v60
    %v105 = vmul.f32 %v101, %v60
    %v106 = vmul.f32 %v102, %v60
    %v107 = vsel %vm64, %v103, 0.0
    %108 = vadd.xlane.f32.xlu0 %v107
    %v109 = vpop.xlane.xlu0 %108
    %v110 = vsel %vm64, %v104, 0.0
    %111 = vadd.xlane.f32.xlu0 %v110
    %v112 = vpop.xlane.xlu0 %111
    %v113 = vsel %vm64, %v105, 0.0
    %114 = vadd.xlane.f32.xlu0 %v113
    %v115 = vpop.xlane.xlu0 %114
    %vm116 = vcmask 254976
    %v117 = vsel %vm116, %v106, 0.0
    %118 = vadd.xlane.f32.xlu0 %v117
    %v119 = vpop.xlane.xlu0 %118
    %v120 = vadd.f32 %v109, %v76
    %v121 = vadd.f32 %v112, %v76
    %v122 = vadd.f32 %v115, %v76
    %v123 = vadd.f32 %v119, %v76
    %v124 = vmul.f32 %v120, 0.5
    %v125 = vmul.f32 %v121, 0.5
    %v126 = vmul.f32 %v122, 0.5
    %v127 = vmul.f32 %v123, 0.5
    %v128 = vtanh.pop %v124
    %v129 = vtanh.pop %v125
    %v130 = vtanh.pop %v126
    %v131 = vtanh.pop %v127
    %v132 = vmul.f32 %v128, 0.5
    %v133 = vmul.f32 %v129, 0.5
    %v134 = vmul.f32 %v130, 0.5
    %v135 = vmul.f32 %v131, 0.5
    %v136 = vadd.f32 %v132, 0.5
    %v137 = vadd.f32 %v133, 0.5
    %v138 = vadd.f32 %v134, 0.5
    %v139 = vadd.f32 %v135, 0.5
    %v144 = vperm.slane %v136, %v90
    %v145 = vperm.slane %v137, %v92
    %v146 = vsel %vm94, %v145, %v144
    %v147 = vadd.s32 %v90, 4294967280
    %v148 = vperm.slane %v138, %v147
    %vm149 = vcmask 195712
    %v150 = vsel %vm149, %v148, %v146
    %v151 = vadd.s32 %v90, 4294967272
    %v152 = vperm.slane %v139, %v151
    %vm153 = vcmask 261312
    %v154 = vsel %vm153, %v152, %v150
    %vm156 = vcmask 204800
    %157 = vst.msk [vmem:[#allocation9] sm:$0x1] %vm156, %v154
    // Predicated region
    $region26: #{tpu_custom_call.1} parent=1 // pred_check
      _
    $region27: #{tpu_custom_call.1} parent=1 // pred_check_branch
      %159 = sbr.rel (0) target = $region29
    $region28: #{tpu_custom_call.1} parent=1 // pred_region
      %161 = vsyncadd [#allocation5], 0
      %s163 = sshll.u32 [#allocation8], 4
      %s164 = int_to_ptr.vmem [resolvable:$true] %s163
      %s165 = sshll.u32 %s4, 4
      %s166 = int_to_ptr.hbm [resolvable:$true] %s165
      %168 = dma.vmem_to_hbm [thread:$0]  %s164, 16, %s166, [#allocation5]
    $region29: #{tpu_custom_call.1} parent=1 // pred_fallthru
      _
    // Predicated region
    $region30: #{tpu_custom_call.1} parent=1 // pred_check
      _
    $region31: #{tpu_custom_call.1} parent=1 // pred_check_branch
      %170 = sbr.rel (0) target = $region33
    $region32: #{tpu_custom_call.1} parent=1 // pred_region
      %172 = vsyncadd [#allocation10], 0
      %s174 = sshll.u32 [#allocation9], 4
      %s175 = int_to_ptr.vmem [resolvable:$true] %s174
      %s176 = sshll.u32 %s5, 4
      %s177 = int_to_ptr.hbm [resolvable:$true] %s176
      %179 = dma.vmem_to_hbm [thread:$0]  %s175, 16, %s177, [#allocation10]
    $region33: #{tpu_custom_call.1} parent=1 // pred_fallthru
      _
    // Predicated region
    $region34: #{tpu_custom_call.1} parent=1 // pred_check
      _
    $region35: #{tpu_custom_call.1} parent=1 // pred_check_branch
      %181 = sbr.rel (0) target = $region37
    $region36: #{tpu_custom_call.1} parent=1 // pred_region
      %183 = dma.done [#allocation5], 16
    $region37: #{tpu_custom_call.1} parent=1 // pred_fallthru
      _
    // Predicated region
    $region38: #{tpu_custom_call.1} parent=1 // pred_check
      _
    $region39: #{tpu_custom_call.1} parent=1 // pred_check_branch
      %185 = sbr.rel (0) target = $region41
    $region40: #{tpu_custom_call.1} parent=1 // pred_region
      %187 = dma.done [#allocation10], 16
    $region41: #{tpu_custom_call.1} parent=1 // pred_fallthru
      _
    %188 = vsyncpa [#allocation4], 1
    %189 = vsyncpa [#allocation7], 1
    %190 = vsyncpa [#allocation5], 1
    %191 = vsyncpa [#allocation10], 1

</llo_original>
